<compile_context>
chip_gen: v7x
topology: tpu7x:2x2x1
jax: 0.10.0
libtpu: 0.0.40
codegen_flags: <defaults>
</compile_context>

<pallas_src>
import functools

import jax
import jax.numpy as jnp
from jax.experimental import pallas as pl
from jax.experimental.pallas import tpu as pltpu


def _decomp_kernel(x_ref, mean_ref, res_ref, xp_ref, *, kernel_size, pad,
                   seq_len, channels):
    # x_ref:    (Bt, W)        flattened (L, C) input block, W = L*C (lane-dense)
    # mean_ref: (Bt, W)        moving-average output block
    # res_ref:  (Bt, W)        residual output block
    # xp_ref:   (Bt, (L+2p)*C) VMEM scratch holding the replicate-padded block
    k = kernel_size
    C = channels
    W = seq_len * C

    x = x_ref[...]  # (Bt, W), input dtype

    # --- Build replicate-edge padded copy in VMEM scratch (input dtype). ---
    xp_ref[:, pad * C: pad * C + W] = x
    if pad > 0:
        first = x[:, :C]        # first time step, (Bt, C)
        last = x[:, W - C:]     # last time step,  (Bt, C)
        for p in range(pad):    # pad is small (e.g. 5); tiny VMEM stores
            xp_ref[:, p * C: (p + 1) * C] = first
            off = pad * C + W + p * C
            xp_ref[:, off: off + C] = last

    # --- Sliding-window sum along time: stride C in the flat layout. ---
    # f32 accumulation; each shifted window is streamed straight from scratch.
    acc = xp_ref[:, 0:W].astype(jnp.float32)
    for i in range(1, k):
        acc = acc + xp_ref[:, i * C: i * C + W].astype(jnp.float32)

    mean = acc * (1.0 / k)
    mean_ref[...] = mean.astype(mean_ref.dtype)
    res_ref[...] = (x.astype(jnp.float32) - mean).astype(res_ref.dtype)


def _pick_batch_tile(B, L, C, pad, itemsize):
    """Largest batch tile that fits a conservative double-buffered VMEM budget."""
    W = L * C
    Lp = L + 2 * pad
    # x / mean / res blocks are double-buffered by the pipeline; scratch is single.
    per_batch = 3 * 2 * W * itemsize + Lp * C * itemsize + W * 4  # + f32 acc vregs
    budget = 8 * 1024 * 1024  # safe across v5e/v6e and v7x's 64 MiB VMEM
    bt = max(1, budget // max(per_batch, 1))
    if bt >= B:
        return B  # whole batch in one block (block dim == full array dim)
    # Keep the sublane (second-to-last) block dim a multiple of 8 when tiling.
    bt = max(8, (bt // 8) * 8)
    # Prefer >= 2 grid steps so v7x's two TensorCores both get work.
    if B >= 16:
        while bt > 8 and pl.cdiv(B, bt) < 2:
            bt = max(8, (bt // 2 // 8) * 8)
    return min(bt, B)


def series_decomp(x, kernel_size):
    """Returns (moving_mean, residual), both shaped like x = (B, L, C)."""
    B, L, C = x.shape
    assert kernel_size % 2 == 1, "series_decomp requires odd kernel_size"
    pad = (kernel_size - 1) // 2
    W = L * C
    Lp = L + 2 * pad

    # Free contiguous collapse (L, C) -> W: makes the last (lane) dim dense.
    x_flat = x.reshape(B, W)

    bt = _pick_batch_tile(B, L, C, pad, x.dtype.itemsize)
    grid = (pl.cdiv(B, bt),)

    kernel = functools.partial(
        _decomp_kernel, kernel_size=kernel_size, pad=pad, seq_len=L, channels=C
    )

    nbytes = x.size * x.dtype.itemsize
    cost = pl.CostEstimate(
        flops=2 * x.size * (kernel_size + 1),
        transcendentals=0,
        bytes_accessed=3 * nbytes,  # read x once, write mean + res
    )

    mean_flat, res_flat = pl.pallas_call(
        kernel,
        out_shape=(
            jax.ShapeDtypeStruct((B, W), x.dtype),
            jax.ShapeDtypeStruct((B, W), x.dtype),
        ),
        grid_spec=pltpu.PrefetchScalarGridSpec(
            num_scalar_prefetch=0,
            grid=grid,
            in_specs=[pl.BlockSpec((bt, W), lambda b: (b, 0))],
            out_specs=[
                pl.BlockSpec((bt, W), lambda b: (b, 0)),
                pl.BlockSpec((bt, W), lambda b: (b, 0)),
            ],
            scratch_shapes=[pltpu.VMEM((bt, Lp * C), x.dtype)],
        ),
        compiler_params=pltpu.CompilerParams(
            dimension_semantics=("parallel",),
            vmem_limit_bytes=32 * 1024 * 1024,
        ),
        cost_estimate=cost,
    )(x_flat)

    return mean_flat.reshape(B, L, C), res_flat.reshape(B, L, C)


def _reference_series_decomp(x, kernel_size):
    """Pure-JAX reference mirroring the PyTorch module exactly."""
    pad = (kernel_size - 1) // 2
    front = jnp.repeat(x[:, 0:1, :], pad, axis=1)
    end = jnp.repeat(x[:, -1:, :], pad, axis=1)
    xpad = jnp.concatenate([front, x, end], axis=1)
    L = x.shape[1]
    windows = jnp.stack(
        [xpad[:, i: i + L, :] for i in range(kernel_size)], axis=0
    )
    mean = jnp.mean(windows, axis=0)
    return mean, x - mean


if __name__ == "__main__":
    key = jax.random.PRNGKey(0)

    # Primary test (matches the module's implied shapes / kernel_size=11).
    B, L, C = 2, 16, 8
    kernel_size = 11
    x = jax.random.normal(key, (B, L, C), dtype=jnp.float32)

    mean, res = series_decomp(x, kernel_size)
    jax.block_until_ready((mean, res))

    ref_mean, ref_res = _reference_series_decomp(x, kernel_size)
    assert mean.shape == (B, L, C) and res.shape == (B, L, C)
    assert jnp.allclose(mean, ref_mean, atol=1e-5, rtol=1e-5)
    assert jnp.allclose(res, ref_res, atol=1e-5, rtol=1e-5)
    # Decomposition identity: mean + residual == x
    assert jnp.allclose(mean + res, x, atol=1e-5, rtol=1e-5)

    # Secondary test: odd sizes, width not a multiple of 128, different k.
    key2 = jax.random.PRNGKey(1)
    x2 = jax.random.normal(key2, (3, 20, 5), dtype=jnp.float32)
    mean2, res2 = series_decomp(x2, 7)
    jax.block_until_ready((mean2, res2))
    ref_mean2, ref_res2 = _reference_series_decomp(x2, 7)
    assert jnp.allclose(mean2, ref_mean2, atol=1e-5, rtol=1e-5)
    assert jnp.allclose(res2, ref_res2, atol=1e-5, rtol=1e-5)

    print("KERNEL_OK")
</pallas_src>

<mosaic_0001>
module attributes {stable_mosaic.version = 11 : i64} {
  func.func @_decomp_kernel(%arg0: i32, %arg1: memref<2x128xf32, #tpu.memory_space<vmem>>, %arg2: memref<2x128xf32, #tpu.memory_space<vmem>>, %arg3: memref<2x128xf32, #tpu.memory_space<vmem>>, %arg4: memref<2x208xf32, #tpu.memory_space<vmem>>) attributes {dimension_semantics = [#tpu.dimension_semantics<parallel>], iteration_bounds = array<i64: 1>, scalar_prefetch = 0 : i64, scratch_operands = 1 : i64, tpu.core_type = #tpu.core_type<tc>, window_params = [{transform_indices = @transform_0, window_bounds = array<i64: 2, 128>}, {transform_indices = @transform_1, window_bounds = array<i64: 2, 128>}, {transform_indices = @transform_2, window_bounds = array<i64: 2, 128>}]} {
    %c0 = arith.constant 0 : index
    %c0_0 = arith.constant 0 : index
    %0 = vector.load %arg1[%c0, %c0_0] : memref<2x128xf32, #tpu.memory_space<vmem>>, vector<2x128xf32>
    %c0_1 = arith.constant 0 : index
    %c40 = arith.constant 40 : index
    %1 = vector.load %arg4[%c0_1, %c40] : memref<2x208xf32, #tpu.memory_space<vmem>>, vector<2x128xf32>
    tpu.vector_store %arg4[%c0_1, %c40], %0 {strides = array<i32>} : memref<2x208xf32, #tpu.memory_space<vmem>>, vector<2x128xf32>,
    %2 = vector.extract_strided_slice %0 {offsets = [0, 0], sizes = [2, 8], strides = [1, 1]} : vector<2x128xf32> to vector<2x8xf32>
    %3 = vector.extract_strided_slice %0 {offsets = [0, 120], sizes = [2, 8], strides = [1, 1]} : vector<2x128xf32> to vector<2x8xf32>
    %c0_2 = arith.constant 0 : index
    %c0_3 = arith.constant 0 : index
    %4 = vector.load %arg4[%c0_2, %c0_3] : memref<2x208xf32, #tpu.memory_space<vmem>>, vector<2x8xf32>
    tpu.vector_store %arg4[%c0_2, %c0_3], %2 {strides = array<i32>} : memref<2x208xf32, #tpu.memory_space<vmem>>, vector<2x8xf32>,
    %c0_4 = arith.constant 0 : index
    %c168 = arith.constant 168 : index
    %5 = vector.load %arg4[%c0_4, %c168] : memref<2x208xf32, #tpu.memory_space<vmem>>, vector<2x8xf32>
    tpu.vector_store %arg4[%c0_4, %c168], %3 {strides = array<i32>} : memref<2x208xf32, #tpu.memory_space<vmem>>, vector<2x8xf32>,
    %c0_5 = arith.constant 0 : index
    %c8 = arith.constant 8 : index
    %6 = vector.load %arg4[%c0_5, %c8] : memref<2x208xf32, #tpu.memory_space<vmem>>, vector<2x8xf32>
    tpu.vector_store %arg4[%c0_5, %c8], %2 {strides = array<i32>} : memref<2x208xf32, #tpu.memory_space<vmem>>, vector<2x8xf32>,
    %c0_6 = arith.constant 0 : index
    %c176 = arith.constant 176 : index
    %7 = vector.load %arg4[%c0_6, %c176] : memref<2x208xf32, #tpu.memory_space<vmem>>, vector<2x8xf32>
    tpu.vector_store %arg4[%c0_6, %c176], %3 {strides = array<i32>} : memref<2x208xf32, #tpu.memory_space<vmem>>, vector<2x8xf32>,
    %c0_7 = arith.constant 0 : index
    %c16 = arith.constant 16 : index
    %8 = vector.load %arg4[%c0_7, %c16] : memref<2x208xf32, #tpu.memory_space<vmem>>, vector<2x8xf32>
    tpu.vector_store %arg4[%c0_7, %c16], %2 {strides = array<i32>} : memref<2x208xf32, #tpu.memory_space<vmem>>, vector<2x8xf32>,
    %c0_8 = arith.constant 0 : index
    %c184 = arith.constant 184 : index
    %9 = vector.load %arg4[%c0_8, %c184] : memref<2x208xf32, #tpu.memory_space<vmem>>, vector<2x8xf32>
    tpu.vector_store %arg4[%c0_8, %c184], %3 {strides = array<i32>} : memref<2x208xf32, #tpu.memory_space<vmem>>, vector<2x8xf32>,
    %c0_9 = arith.constant 0 : index
    %c24 = arith.constant 24 : index
    %10 = vector.load %arg4[%c0_9, %c24] : memref<2x208xf32, #tpu.memory_space<vmem>>, vector<2x8xf32>
    tpu.vector_store %arg4[%c0_9, %c24], %2 {strides = array<i32>} : memref<2x208xf32, #tpu.memory_space<vmem>>, vector<2x8xf32>,
    %c0_10 = arith.constant 0 : index
    %c192 = arith.constant 192 : index
    %11 = vector.load %arg4[%c0_10, %c192] : memref<2x208xf32, #tpu.memory_space<vmem>>, vector<2x8xf32>
    tpu.vector_store %arg4[%c0_10, %c192], %3 {strides = array<i32>} : memref<2x208xf32, #tpu.memory_space<vmem>>, vector<2x8xf32>,
    %c0_11 = arith.constant 0 : index
    %c32 = arith.constant 32 : index
    %12 = vector.load %arg4[%c0_11, %c32] : memref<2x208xf32, #tpu.memory_space<vmem>>, vector<2x8xf32>
    tpu.vector_store %arg4[%c0_11, %c32], %2 {strides = array<i32>} : memref<2x208xf32, #tpu.memory_space<vmem>>, vector<2x8xf32>,
    %c0_12 = arith.constant 0 : index
    %c200 = arith.constant 200 : index
    %13 = vector.load %arg4[%c0_12, %c200] : memref<2x208xf32, #tpu.memory_space<vmem>>, vector<2x8xf32>
    tpu.vector_store %arg4[%c0_12, %c200], %3 {strides = array<i32>} : memref<2x208xf32, #tpu.memory_space<vmem>>, vector<2x8xf32>,
    %c0_13 = arith.constant 0 : index
    %c0_14 = arith.constant 0 : index
    %14 = vector.load %arg4[%c0_13, %c0_14] : memref<2x208xf32, #tpu.memory_space<vmem>>, vector<2x128xf32>
    %c0_15 = arith.constant 0 : index
    %c8_16 = arith.constant 8 : index
    %15 = vector.load %arg4[%c0_15, %c8_16] : memref<2x208xf32, #tpu.memory_space<vmem>>, vector<2x128xf32>
    %16 = arith.addf %14, %15 : vector<2x128xf32>
    %c0_17 = arith.constant 0 : index
    %c16_18 = arith.constant 16 : index
    %17 = vector.load %arg4[%c0_17, %c16_18] : memref<2x208xf32, #tpu.memory_space<vmem>>, vector<2x128xf32>
    %18 = arith.addf %16, %17 : vector<2x128xf32>
    %c0_19 = arith.constant 0 : index
    %c24_20 = arith.constant 24 : index
    %19 = vector.load %arg4[%c0_19, %c24_20] : memref<2x208xf32, #tpu.memory_space<vmem>>, vector<2x128xf32>
    %20 = arith.addf %18, %19 : vector<2x128xf32>
    %c0_21 = arith.constant 0 : index
    %c32_22 = arith.constant 32 : index
    %21 = vector.load %arg4[%c0_21, %c32_22] : memref<2x208xf32, #tpu.memory_space<vmem>>, vector<2x128xf32>
    %22 = arith.addf %20, %21 : vector<2x128xf32>
    %c0_23 = arith.constant 0 : index
    %c40_24 = arith.constant 40 : index
    %23 = vector.load %arg4[%c0_23, %c40_24] : memref<2x208xf32, #tpu.memory_space<vmem>>, vector<2x128xf32>
    %24 = arith.addf %22, %23 : vector<2x128xf32>
    %c0_25 = arith.constant 0 : index
    %c48 = arith.constant 48 : index
    %25 = vector.load %arg4[%c0_25, %c48] : memref<2x208xf32, #tpu.memory_space<vmem>>, vector<2x128xf32>
    %26 = arith.addf %24, %25 : vector<2x128xf32>
    %c0_26 = arith.constant 0 : index
    %c56 = arith.constant 56 : index
    %27 = vector.load %arg4[%c0_26, %c56] : memref<2x208xf32, #tpu.memory_space<vmem>>, vector<2x128xf32>
    %28 = arith.addf %26, %27 : vector<2x128xf32>
    %c0_27 = arith.constant 0 : index
    %c64 = arith.constant 64 : index
    %29 = vector.load %arg4[%c0_27, %c64] : memref<2x208xf32, #tpu.memory_space<vmem>>, vector<2x128xf32>
    %30 = arith.addf %28, %29 : vector<2x128xf32>
    %c0_28 = arith.constant 0 : index
    %c72 = arith.constant 72 : index
    %31 = vector.load %arg4[%c0_28, %c72] : memref<2x208xf32, #tpu.memory_space<vmem>>, vector<2x128xf32>
    %32 = arith.addf %30, %31 : vector<2x128xf32>
    %c0_29 = arith.constant 0 : index
    %c80 = arith.constant 80 : index
    %33 = vector.load %arg4[%c0_29, %c80] : memref<2x208xf32, #tpu.memory_space<vmem>>, vector<2x128xf32>
    %34 = arith.addf %32, %33 : vector<2x128xf32>
    %cst = arith.constant 0.0909090936 : f32
    %35 = vector.broadcast %cst : f32 to vector<2x128xf32>
    %36 = arith.mulf %34, %35 : vector<2x128xf32>
    %c0_30 = arith.constant 0 : index
    %c0_31 = arith.constant 0 : index
    %37 = vector.load %arg2[%c0_30, %c0_31] : memref<2x128xf32, #tpu.memory_space<vmem>>, vector<2x128xf32>
    tpu.vector_store %arg2[%c0_30, %c0_31], %36 {strides = array<i32>} : memref<2x128xf32, #tpu.memory_space<vmem>>, vector<2x128xf32>,
    %38 = arith.subf %0, %36 : vector<2x128xf32>
    %c0_32 = arith.constant 0 : index
    %c0_33 = arith.constant 0 : index
    %39 = vector.load %arg3[%c0_32, %c0_33] : memref<2x128xf32, #tpu.memory_space<vmem>>, vector<2x128xf32>
    tpu.vector_store %arg3[%c0_32, %c0_33], %38 {strides = array<i32>} : memref<2x128xf32, #tpu.memory_space<vmem>>, vector<2x128xf32>,
    return
  }
  func.func @transform_0(%arg0: i32) -> (i32, i32) {
    %c0_i32 = arith.constant 0 : i32
    %c0_i32_0 = arith.constant 0 : i32
    return %arg0, %c0_i32 : i32, i32
  }
  func.func @transform_1(%arg0: i32) -> (i32, i32) {
    %c0_i32 = arith.constant 0 : i32
    %c0_i32_0 = arith.constant 0 : i32
    return %arg0, %c0_i32 : i32, i32
  }
  func.func @transform_2(%arg0: i32) -> (i32, i32) {
    %c0_i32 = arith.constant 0 : i32
    %c0_i32_0 = arith.constant 0 : i32
    return %arg0, %c0_i32 : i32, i32
  }
}

</mosaic_0001>

<llo_original>
// kernel: tpu_custom_call.1
$region0: #{tpu_custom_call.1}
  #allocation0 [shape = 'u32[]', space=smem, size = 0x4, offset = 0x4, fixed_abs, tag = 'smem constant byte address 0x4 - core index']
  #allocation1 [shape = 'u32[144,128]{1,0:T(1,128)}', space=vmem, size = 0x12000, scoped, tag = 'internal scratch']
  #allocation2 [shape = 'f32[2,208]{1,0:T(2,128)}', space=vmem, size = 0x800, scoped, tag = 'scratch operand']
  %s0 = inlined_call_operand.hbm [shape: f32[2,128], index: 0, kind: input, shape index: {}]
  %s1 = inlined_call_operand.hbm [shape: f32[2,128], index: 1, kind: output, shape index: {0}]
  %s2 = inlined_call_operand.hbm [shape: f32[2,128], index: 2, kind: output, shape index: {1}]
  %3 = xla_tuple %s1, %s2
  %s4 = sld [smem:[#allocation0]]
  $region26: #{tpu_custom_call.1} parent=0
    _
  %s6 = ssub.s32 1, %s4
  %s7 = scalar_select 0, %s6, %s4
  $region1: #{tpu_custom_call.1} parent=0
    #allocation3 [shape = 'u8[1024]{0}', space=vmem, size = 0x400, scoped, tag = 'input window, operand 0, single buffered']
    #allocation4 [shape = 's32[1]{0}', space=sflag, size = 0x4, scoped, tag = 'scoped memory for tpu_custom_call.1']
    #allocation5 [shape = 's32[1]{0}', space=sflag, size = 0x4, scoped, tag = 'scoped memory for tpu_custom_call.1']
    #allocation6 [shape = 'u8[1024]{0}', space=vmem, size = 0x400, scoped, tag = 'output window, operand 0, single buffered']
    #allocation7 [shape = 'u8[1024]{0}', space=vmem, size = 0x400, scoped, tag = 'output window, operand 1, single buffered']
    #allocation8 [shape = 's32[1]{0}', space=sflag, size = 0x4, scoped, tag = 'scoped memory for tpu_custom_call.1']
    %8 = vsyncpa [#allocation4], 0
    %9 = vsyncpa [#allocation5], 0
    %10 = vsyncpa [#allocation8], 0
    // Predicated region
    $region2: #{tpu_custom_call.1} parent=1 // pred_check
      _
    $region3: #{tpu_custom_call.1} parent=1 // pred_check_branch
      %12 = sbr.rel (0) target = $region5
    $region4: #{tpu_custom_call.1} parent=1 // pred_region
      %s14 = ssub.s32 32, 32
      %15 = vsyncadd [#allocation4], %s14
      %s17 = sshll.u32 [#allocation3], 4
      %s18 = int_to_ptr.vmem [resolvable:$true] %s17
      %20 = dma.hbm_to_vmem [thread:$0]  %s0, 32, %s18, [#allocation4]
    $region5: #{tpu_custom_call.1} parent=1 // pred_fallthru
      _
    // Predicated region
    $region6: #{tpu_custom_call.1} parent=1 // pred_check
      _
    $region7: #{tpu_custom_call.1} parent=1 // pred_check_branch
      %22 = sbr.rel (0) target = $region9
    $region8: #{tpu_custom_call.1} parent=1 // pred_region
      %23 = dma.done [#allocation4], 32
    $region9: #{tpu_custom_call.1} parent=1 // pred_fallthru
      _
    %v24 = vld [vmem:[#allocation3] sm:$0x3]
    %v27 = vunpack.c.l.s4 1983009808
    %v28 = vunpack.c.0.s8 %v27
    %v29 = vlaneseq
    %v30 = vshrl.u32 %v29, 7
    %v31 = vsub.s32 %v28, %v30
    %v32 = vrot.slane %v24, %v31
    %33 = vrot.lane.b32.xlu0 %v32, 40
    %v34 = vpop.permute.xlu0 %33
    %v35 = vrot.slane %v34, 6
    %vm36 = vcmask 326656
    %v37 = vsel %vm36, %v35, %v34
    %vm39 = vcmask 1041728
    %vm40 = vcmask 322562
    %vm41 = vmor %vm40, %vm39
    %42 = vst.msk [vmem:[#allocation2] sm:$0xf] %vm41, %v37
    %vm43 = vcmask 58368
    %44 = vst.msk [vmem:[#allocation2] sm:$0x3] %vm43, %v24
    %45 = vrot.lane.b32.xlu0 %v32, 48
    %v46 = vpop.permute.xlu0 %45
    %vm48 = vcmask 386368
    %49 = vst.msk [vmem:[#allocation2 + $0x2] sm:$0x3] %vm48, %v46
    %50 = vrot.lane.b32.xlu0 %v32, 8
    %v51 = vpop.permute.xlu0 %50
    %vm53 = vcmask 123968
    %54 = vst.msk [vmem:[#allocation2] sm:$0x3] %vm53, %v51
    %55 = vrot.lane.b32.xlu0 %v32, 56
    %v56 = vpop.permute.xlu0 %55
    %vm58 = vcmask 451968
    %59 = vst.msk [vmem:[#allocation2 + $0x2] sm:$0x3] %vm58, %v56
    %60 = vrot.lane.b32.xlu0 %v32, 16
    %v61 = vpop.permute.xlu0 %60
    %vm63 = vcmask 189568
    %64 = vst.msk [vmem:[#allocation2] sm:$0x3] %vm63, %v61
    %65 = vrot.lane.b32.xlu0 %v32, 64
    %v66 = vpop.permute.xlu0 %65
    %vm68 = vcmask 517568
    %69 = vst.msk [vmem:[#allocation2 + $0x2] sm:$0x3] %vm68, %v66
    %70 = vrot.lane.b32.xlu0 %v32, 24
    %v71 = vpop.permute.xlu0 %70
    %vm73 = vcmask 255168
    %74 = vst.msk [vmem:[#allocation2] sm:$0x3] %vm73, %v71
    %75 = vrot.lane.b32.xlu0 %v32, 72
    %v76 = vpop.permute.xlu0 %75
    %vm78 = vcmask 583168
    %79 = vst.msk [vmem:[#allocation2 + $0x2] sm:$0x3] %vm78, %v76
    %80 = vrot.lane.b32.xlu0 %v32, 32
    %v81 = vpop.permute.xlu0 %80
    %vm83 = vcmask 320768
    %84 = vst.msk [vmem:[#allocation2] sm:$0x3] %vm83, %v81
    %85 = vrot.lane.b32.xlu0 %v32, 80
    %v86 = vpop.permute.xlu0 %85
    %vm88 = vcmask 648768
    %89 = vst.msk [vmem:[#allocation2 + $0x2] sm:$0x3] %vm88, %v86
    %v90 = vld [vmem:[#allocation2] sm:$0x3]
    %v91 = vld [vmem:[#allocation2] sm:$0xf]
    %93 = vrot.lane.b32.xlu0 %v91, 120
    %v94 = vpop.permute.xlu0 %93
    %v95 = vrot.slane %v94, 2
    %vm96 = vcmask 982016
    %v97 = vsel %vm96, %v94, %v95
    %v99 = vadd.f32 %v90, %v97
    %100 = vrot.lane.b32.xlu0 %v91, 112
    %v101 = vpop.permute.xlu0 %100
    %v102 = vrot.slane %v101, 2
    %vm103 = vcmask 916480
    %v104 = vsel %vm103, %v101, %v102
    %v106 = vadd.f32 %v99, %v104
    %107 = vrot.lane.b32.xlu0 %v91, 104
    %v108 = vpop.permute.xlu0 %107
    %v109 = vrot.slane %v108, 2
    %vm110 = vcmask 850944
    %v111 = vsel %vm110, %v108, %v109
    %v113 = vadd.f32 %v106, %v111
    %114 = vrot.lane.b32.xlu0 %v91, 96
    %v115 = vpop.permute.xlu0 %114
    %v116 = vrot.slane %v115, 2
    %vm117 = vcmask 785408
    %v118 = vsel %vm117, %v115, %v116
    %v120 = vadd.f32 %v113, %v118
    %121 = vrot.lane.b32.xlu0 %v91, 88
    %v122 = vpop.permute.xlu0 %121
    %v123 = vrot.slane %v122, 2
    %vm124 = vcmask 719872
    %v125 = vsel %vm124, %v122, %v123
    %v127 = vadd.f32 %v120, %v125
    %128 = vrot.lane.b32.xlu0 %v91, 80
    %v129 = vpop.permute.xlu0 %128
    %v130 = vrot.slane %v129, 2
    %vm131 = vcmask 654336
    %v132 = vsel %vm131, %v129, %v130
    %v134 = vadd.f32 %v127, %v132
    %135 = vrot.lane.b32.xlu0 %v91, 72
    %v136 = vpop.permute.xlu0 %135
    %v137 = vrot.slane %v136, 2
    %vm138 = vcmask 588800
    %v139 = vsel %vm138, %v136, %v137
    %v141 = vadd.f32 %v134, %v139
    %142 = vrot.lane.b32.xlu0 %v91, 64
    %v143 = vpop.permute.xlu0 %142
    %v144 = vrot.slane %v143, 2
    %vm145 = vcmask 523264
    %v146 = vsel %vm145, %v143, %v144
    %v148 = vadd.f32 %v141, %v146
    %149 = vrot.lane.b32.xlu0 %v91, 56
    %v150 = vpop.permute.xlu0 %149
    %v151 = vrot.slane %v150, 2
    %vm152 = vcmask 457728
    %v153 = vsel %vm152, %v150, %v151
    %v155 = vadd.f32 %v148, %v153
    %156 = vrot.lane.b32.xlu0 %v91, 48
    %v157 = vpop.permute.xlu0 %156
    %v158 = vrot.slane %v157, 2
    %vm159 = vcmask 392192
    %v160 = vsel %vm159, %v157, %v158
    %v162 = vadd.f32 %v155, %v160
    %v163 = vmul.f32 %v162, 0.09090909
    %164 = vst [vmem:[#allocation6] sm:$0x3] %v163
    %v165 = vsub.f32 %v24, %v163
    %166 = vst [vmem:[#allocation7] sm:$0x3] %v165
    // Predicated region
    $region10: #{tpu_custom_call.1} parent=1 // pred_check
      _
    $region11: #{tpu_custom_call.1} parent=1 // pred_check_branch
      %168 = sbr.rel (0) target = $region13
    $region12: #{tpu_custom_call.1} parent=1 // pred_region
      %s170 = ssub.s32 32, 32
      %171 = vsyncadd [#allocation5], %s170
      %s173 = sshll.u32 [#allocation6], 4
      %s174 = int_to_ptr.vmem [resolvable:$true] %s173
      %176 = dma.vmem_to_hbm [thread:$0]  %s174, 32, %s1, [#allocation5]
    $region13: #{tpu_custom_call.1} parent=1 // pred_fallthru
      _
    // Predicated region
    $region14: #{tpu_custom_call.1} parent=1 // pred_check
      _
    $region15: #{tpu_custom_call.1} parent=1 // pred_check_branch
      %178 = sbr.rel (0) target = $region17
    $region16: #{tpu_custom_call.1} parent=1 // pred_region
      %s180 = ssub.s32 32, 32
      %181 = vsyncadd [#allocation8], %s180
      %s183 = sshll.u32 [#allocation7], 4
      %s184 = int_to_ptr.vmem [resolvable:$true] %s183
      %186 = dma.vmem_to_hbm [thread:$0]  %s184, 32, %s2, [#allocation8]
    $region17: #{tpu_custom_call.1} parent=1 // pred_fallthru
      _
    // Predicated region
    $region18: #{tpu_custom_call.1} parent=1 // pred_check
      _
    $region19: #{tpu_custom_call.1} parent=1 // pred_check_branch
      %188 = sbr.rel (0) target = $region21
    $region20: #{tpu_custom_call.1} parent=1 // pred_region
      %189 = dma.done [#allocation5], 32
    $region21: #{tpu_custom_call.1} parent=1 // pred_fallthru
      _
    // Predicated region
    $region22: #{tpu_custom_call.1} parent=1 // pred_check
      _
    $region23: #{tpu_custom_call.1} parent=1 // pred_check_branch
      %191 = sbr.rel (0) target = $region25
    $region24: #{tpu_custom_call.1} parent=1 // pred_region
      %192 = dma.done [#allocation8], 32
    $region25: #{tpu_custom_call.1} parent=1 // pred_fallthru
      _
    %193 = vsyncpa [#allocation4], 1
    %194 = vsyncpa [#allocation5], 1
    %195 = vsyncpa [#allocation8], 1

</llo_original>
